<compile_context>
chip_gen: v6e
topology: v6e:2x2x1
jax: 0.10.0
libtpu: 0.0.40
codegen_flags: <defaults>
</compile_context>

<pallas_src>
import jax
import jax.numpy as jnp
from jax.experimental import pallas as pl
from jax.experimental.pallas import tpu as pltpu


def _describe_kernel(att_ref, ptr_ref, vision_ref, mem_ref):
    """One grid step = one block of `bb` batches.

    att_ref    : (bb, G, S, N)  att_stack block, stack axis S on sublanes, objects N on lanes
    ptr_ref    : (B, S, 1)      full stack_ptr, resident in VMEM for the whole grid
    vision_ref : (bb, N, D)     vision features for this batch block
    mem_ref    : (bb*G, D)      dense output block (viewed as (B, G*D) by the wrapper)
    """
    bb = att_ref.shape[0]

    # Rows of the resident stack_ptr belonging to this block.  bb is either a multiple
    # of 8 or the whole batch, so this sublane slice stays aligned.
    start = pl.multiple_of(pl.program_id(0) * bb, bb)
    p = ptr_ref[pl.ds(start, bb), :, :].astype(jnp.float32)          # (bb, S, 1)

    a = att_ref[...].astype(jnp.float32)                             # (bb, G, S, N)
    v = vision_ref[...].astype(jnp.float32)                          # (bb, N, D)

    # _read_from_stack: weighted sum over the stack axis S.  S sits on sublanes for
    # both `a` and `p`, so this is a dense VPU multiply (p lane-splat over N) plus a
    # sublane reduction, accumulated in f32.
    att = jnp.sum(a * p[:, None, :, :], axis=2)                      # (bb, G, N)

    # bmm(att_in, vision_feat): one batched dot_general contracting the object axis N.
    # Tiny M (=G) rows per batch; the op is HBM-bound so this hides under the
    # vision_feat DMA.  (Swap for a VPU multiply-accumulate over N only if a bundle
    # dump ever shows it exposed on v7x.)
    mem = jnp.einsum("bgn,bnd->bgd", att, v,
                     preferred_element_type=jnp.float32)             # (bb, G, D)

    # Dense store: (bb, G, D) -> (bb*G, D) is a small sublane repack (same head-merge
    # reshape pattern used by the stock Pallas GQA attention kernels); the destination
    # block has no G->8 sublane padding and stores are unmasked for aligned shapes.
    mem_ref[...] = mem.reshape(mem_ref.shape).astype(mem_ref.dtype)


def _padded_tile_bytes(shape, itemsize=4):
    """Approximate VMEM bytes of one tile after (8, 128) padding of the trailing dims."""
    second = -(-int(shape[-2]) // 8) * 8
    last = -(-int(shape[-1]) // 128) * 128
    lead = 1
    for s in shape[:-2]:
        lead *= int(s)
    return lead * second * last * itemsize


def _tpu_memory_config():
    """Generation-aware (vmem_limit_bytes, tiling budget, num TensorCores).

    v5e/v6e: 128 MiB VMEM, 1 TC  -> limit ~96 MiB, budget ~72 MiB
    v7x    :  64 MiB VMEM, 2 TCs -> limit ~48 MiB, budget ~36 MiB
    Falls back to the conservative v7x numbers if the hardware query fails.
    """
    vmem_bytes = None
    try:
        info = pltpu.get_tpu_info()
        vmem_bytes = getattr(info, "vmem_capacity_bytes", None)
    except Exception:
        vmem_bytes = None
    if not vmem_bytes:
        vmem_bytes = 64 * 1024 * 1024

    num_tc = 1
    try:
        kind = jax.devices()[0].device_kind.lower()
        if "v7" in kind or "7x" in kind:
            num_tc = 2
    except Exception:
        pass

    vmem_limit = min(3 * vmem_bytes // 4, 100 * 1024 * 1024)
    if num_tc >= 2:
        vmem_limit = min(vmem_limit, 48 * 1024 * 1024)   # 64 MiB physical on v7x
    budget = 3 * vmem_limit // 4                          # headroom for double buffers
    return int(vmem_limit), int(budget), num_tc


def _choose_batch_block(B, N, G, S, D, budget, num_tc):
    """Batches per grid step: a divisor of B that is a multiple of 8 (or B itself),
    the largest whose double-buffered tiles fit the generation-aware VMEM budget."""

    def block_bytes(bb):
        # att_stack + vision + out change every step -> double buffered; ptr is resident.
        return (2 * (_padded_tile_bytes((bb, G, S, N))
                     + _padded_tile_bytes((bb, N, D))
                     + _padded_tile_bytes((bb * G, D)))
                + _padded_tile_bytes((B, S, 1)))

    cands = [d for d in range(8, B, 8) if B % d == 0] + [B]
    fits = [d for d in cands if block_bytes(d) <= budget]
    bb = fits[-1] if fits else cands[0]

    if num_tc >= 2 and bb == B and B >= 16:
        # v7x only: keep an even number of >=8-batch blocks so both TensorCores stream
        # their own share of HBM.  On 1-TC v5e/v6e splitting is pure overhead.
        smaller = [d for d in fits if d < B and (B // d) % 2 == 0]
        if smaller:
            bb = smaller[-1]
    return bb


def describe_module(vision_feat, feat, feat_edge, c_i, relation_mask,
                    att_stack, stack_ptr, mem_in, *, batch_block=None):
    """Pallas implementation of DescribeModule.forward.

    feat / feat_edge / c_i / relation_mask / mem_in are unused by the module
    (feat only supplies the batch size), mirroring the PyTorch code.
    """
    del feat, feat_edge, c_i, relation_mask, mem_in
    B, N, G, S = att_stack.shape
    D = vision_feat.shape[-1]

    vmem_limit, budget, num_tc = _tpu_memory_config()
    bb = (batch_block if batch_block is not None
          else _choose_batch_block(B, N, G, S, D, budget, num_tc))
    assert B % bb == 0, "batch block must divide the batch size"
    assert bb % 8 == 0 or bb == B, \
        "batch block must be a multiple of 8 (or the full batch) for the dense output"
    num_blocks = B // bb

    # Layout plumbing outside the kernel (tiny tensors): stack axis S on sublanes and
    # object axis N on lanes for att_stack; stack_ptr as (B, S, 1) so its in-kernel
    # broadcast against att is a pure lane splat.
    att_t = jnp.transpose(att_stack, (0, 2, 3, 1))                   # (B, G, S, N)
    ptr_t = stack_ptr.reshape(B, S, 1)                               # (B, S, 1)

    mem_out = pl.pallas_call(
        _describe_kernel,
        out_shape=jax.ShapeDtypeStruct((B * G, D), vision_feat.dtype),
        grid_spec=pltpu.PrefetchScalarGridSpec(
            num_scalar_prefetch=0,
            grid=(num_blocks,),
            in_specs=[
                pl.BlockSpec((bb, G, S, N), lambda b: (b, 0, 0, 0)),
                # stack_ptr is tiny: keep the whole array resident in VMEM across the
                # grid instead of a per-step DMA; the kernel slices its rows with pl.ds.
                pl.BlockSpec((B, S, 1), lambda b: (0, 0, 0)),
                pl.BlockSpec((bb, N, D), lambda b: (b, 0, 0)),
            ],
            out_specs=pl.BlockSpec((bb * G, D), lambda b: (b, 0)),
        ),
        compiler_params=pltpu.CompilerParams(
            # Independent batch blocks; on v7x this lets the two TensorCores split the
            # grid (switch to pltpu.CORE_PARALLEL if a Mosaic dump shows no sharding).
            dimension_semantics=("parallel",),
            vmem_limit_bytes=vmem_limit,
        ),
    )(att_t, ptr_t, vision_feat)

    # (B*G, D) and (B, G*D) share the same HBM layout, so this view is free and matches
    # mem_out.view(batch_size, -1) in the PyTorch module.
    mem_out = mem_out.reshape(B, G * D)

    # att_stack and stack_ptr are returned unchanged, exactly as in PyTorch.
    return att_stack, stack_ptr, mem_out


if __name__ == "__main__":
    def _run_and_check(B, N, G, S, D, batch_block=None):
        key = jax.random.PRNGKey(0)
        k = jax.random.split(key, 6)

        vision_feat = jax.random.normal(k[0], (B, N, D), dtype=jnp.float32)
        feat = jax.random.normal(k[1], (B, N, D), dtype=jnp.float32)            # unused
        feat_edge = jax.random.normal(k[2], (B, N, N, D), dtype=jnp.float32)    # unused
        c_i = jax.random.normal(k[3], (B, D), dtype=jnp.float32)                # unused
        relation_mask = jnp.ones((B, N, N), dtype=jnp.float32)                  # unused
        att_stack = jax.random.uniform(k[4], (B, N, G, S), dtype=jnp.float32)
        stack_ptr = jax.nn.softmax(
            jax.random.normal(k[5], (B, S), dtype=jnp.float32), axis=-1)
        mem_in = jnp.zeros((B, G * D), dtype=jnp.float32)                        # unused

        out_stack, out_ptr, mem_out = describe_module(
            vision_feat, feat, feat_edge, c_i, relation_mask,
            att_stack, stack_ptr, mem_in, batch_block=batch_block)
        jax.block_until_ready(mem_out)

        # Reference (plain JAX) check of the hot path.
        mem_ref = jnp.einsum("bngs,bs,bnd->bgd", att_stack, stack_ptr,
                             vision_feat).reshape(B, G * D)
        assert mem_out.shape == (B, G * D)
        assert jnp.allclose(mem_out, mem_ref, atol=1e-5, rtol=1e-5)
        assert out_stack.shape == att_stack.shape and out_ptr.shape == stack_ptr.shape

    # Small demo shape: single batch block, dense (bb*G, D) store path.
    _run_and_check(B=8, N=16, G=2, S=8, D=128)
    # Multi-block shape: exercises the grid loop, the resident stack_ptr slicing at a
    # nonzero offset, and aligned (bb % 8 == 0) batch blocks.
    _run_and_check(B=16, N=16, G=2, S=8, D=128, batch_block=8)

    print("KERNEL_OK")
</pallas_src>

<mosaic_0001>
module attributes {stable_mosaic.version = 11 : i64} {
  func.func @_describe_kernel(%arg0: i32, %arg1: memref<8x2x8x16xf32, #tpu.memory_space<vmem>>, %arg2: memref<8x8x1xf32, #tpu.memory_space<vmem>>, %arg3: memref<8x16x128xf32, #tpu.memory_space<vmem>>, %arg4: memref<16x128xf32, #tpu.memory_space<vmem>>) attributes {dimension_semantics = [#tpu.dimension_semantics<parallel>], iteration_bounds = array<i64: 1>, scalar_prefetch = 0 : i64, scratch_operands = 0 : i64, tpu.core_type = #tpu.core_type<tc>, window_params = [{transform_indices = @transform_0, window_bounds = array<i64: 8, 2, 8, 16>}, {pipeline_mode = #tpu.pipeline_mode<synchronous>, transform_indices = @transform_1, window_bounds = array<i64: 8, 8, 1>}, {transform_indices = @transform_2, window_bounds = array<i64: 8, 16, 128>}, {transform_indices = @transform_3, window_bounds = array<i64: 16, 128>}]} {
    %c8_i32 = arith.constant 8 : i32
    %0 = arith.muli %arg0, %c8_i32 : i32
    %1 = tpu.assume_multiple %0, 8 : i32
    %2 = arith.index_cast %1 : i32 to index
    %c0 = arith.constant 0 : index
    %c0_0 = arith.constant 0 : index
    %3 = vector.load %arg2[%2, %c0, %c0_0] : memref<8x8x1xf32, #tpu.memory_space<vmem>>, vector<8x8x1xf32>
    %c0_1 = arith.constant 0 : index
    %c0_2 = arith.constant 0 : index
    %c0_3 = arith.constant 0 : index
    %c0_4 = arith.constant 0 : index
    %4 = vector.load %arg1[%c0_1, %c0_2, %c0_3, %c0_4] : memref<8x2x8x16xf32, #tpu.memory_space<vmem>>, vector<8x2x8x16xf32>
    %c0_5 = arith.constant 0 : index
    %c0_6 = arith.constant 0 : index
    %c0_7 = arith.constant 0 : index
    %5 = vector.load %arg3[%c0_5, %c0_6, %c0_7] : memref<8x16x128xf32, #tpu.memory_space<vmem>>, vector<8x16x128xf32>
    %6 = vector.shape_cast %3 : vector<8x8x1xf32> to vector<8x1x8x1xf32>
    %7 = vector.broadcast %6 : vector<8x1x8x1xf32> to vector<8x2x8x16xf32>
    %8 = arith.mulf %4, %7 : vector<8x2x8x16xf32>
    %cst = arith.constant dense<0.000000e+00> : vector<8x2x16xf32>
    %9 = vector.multi_reduction <add>, %8, %cst [2] : vector<8x2x8x16xf32> to vector<8x2x16xf32>
    "tpu.trace_start"() <{level = 10 : i32, message = "bgn,bnd->bgd"}> : () -> ()
    %cst_8 = arith.constant dense<0.000000e+00> : vector<8x2x128xf32>
    %10 = tpu.matmul %9, %5, %cst_8 {dimension_numbers = #tpu.dot_dimension_numbers<[2], [1], [1], [2], [0, 0, 0, 1, 1, 2], [0], [0]>} : vector<8x2x16xf32>, vector<8x16x128xf32>, vector<8x2x128xf32> -> vector<8x2x128xf32>
    "tpu.trace_stop"() : () -> ()
    %11 = vector.shape_cast %10 : vector<8x2x128xf32> to vector<16x128xf32>
    %c0_9 = arith.constant 0 : index
    %c0_10 = arith.constant 0 : index
    %12 = vector.load %arg4[%c0_9, %c0_10] : memref<16x128xf32, #tpu.memory_space<vmem>>, vector<16x128xf32>
    tpu.vector_store %arg4[%c0_9, %c0_10], %11 {strides = array<i32>} : memref<16x128xf32, #tpu.memory_space<vmem>>, vector<16x128xf32>,
    return
  }
  func.func @transform_0(%arg0: i32) -> (i32, i32, i32, i32) {
    %c0_i32 = arith.constant 0 : i32
    %c0_i32_0 = arith.constant 0 : i32
    %c0_i32_1 = arith.constant 0 : i32
    %c0_i32_2 = arith.constant 0 : i32
    return %arg0, %c0_i32, %c0_i32_0, %c0_i32_1 : i32, i32, i32, i32
  }
  func.func @transform_1(%arg0: i32) -> (i32, i32, i32) {
    %c0_i32 = arith.constant 0 : i32
    %c0_i32_0 = arith.constant 0 : i32
    %c0_i32_1 = arith.constant 0 : i32
    %c0_i32_2 = arith.constant 0 : i32
    return %c0_i32, %c0_i32_0, %c0_i32_1 : i32, i32, i32
  }
  func.func @transform_2(%arg0: i32) -> (i32, i32, i32) {
    %c0_i32 = arith.constant 0 : i32
    %c0_i32_0 = arith.constant 0 : i32
    %c0_i32_1 = arith.constant 0 : i32
    return %arg0, %c0_i32, %c0_i32_0 : i32, i32, i32
  }
  func.func @transform_3(%arg0: i32) -> (i32, i32) {
    %c0_i32 = arith.constant 0 : i32
    %c0_i32_0 = arith.constant 0 : i32
    return %arg0, %c0_i32 : i32, i32
  }
}

</mosaic_0001>

<llo_original>
// kernel: tpu_custom_call.1
$region0: #{tpu_custom_call.1}
  #allocation0 [shape = 'u32[]', space=smem, size = 0x4, offset = 0x4, fixed_abs, tag = 'smem constant byte address 0x4 - core index']
  #allocation1 [shape = 'u32[144,128]{1,0:T(1,128)}', space=vmem, size = 0x12000, scoped, tag = 'internal scratch']
  %s0 = inlined_call_operand.hbm [shape: f32[8,2,8,16], index: 0, kind: input, shape index: {}]
  %s1 = inlined_call_operand.vmem [shape: f32[8,8,1], index: 1, kind: input, shape index: {}]
  %s2 = inlined_call_operand.hbm [shape: f32[8,16,128], index: 2, kind: input, shape index: {}]
  %s3 = inlined_call_operand.hbm [shape: f32[16,128], index: 3, kind: output, shape index: {}]
  %s4 = sld [smem:[#allocation0]]
  $region30: #{tpu_custom_call.1} parent=0
    _
  %s6 = ssub.s32 1, %s4
  %s7 = scalar_select 0, %s6, %s4
  $region1: #{tpu_custom_call.1} parent=0
    #allocation2 [shape = 'u8[65536]{0}', space=vmem, size = 0x10000, scoped, tag = 'input window, operand 0, single buffered']
    #allocation3 [shape = 's32[1]{0}', space=sflag, size = 0x4, scoped, tag = 'scoped memory for tpu_custom_call.1']
    #allocation4 [shape = 's32[1]{0}', space=sflag, size = 0x4, scoped, tag = 'scoped memory for tpu_custom_call.1']
    #allocation5 [shape = 'u8[65536]{0}', space=vmem, size = 0x10000, scoped, tag = 'input window, operand 2, single buffered']
    #allocation6 [shape = 's32[1]{0}', space=sflag, size = 0x4, scoped, tag = 'scoped memory for tpu_custom_call.1']
    #allocation7 [shape = 'u8[8192]{0}', space=vmem, size = 0x2000, scoped, tag = 'output window, operand 0, single buffered']
    %8 = vsyncpa [#allocation3], 0
    %9 = vsyncpa [#allocation6], 0
    %10 = vsyncpa [#allocation4], 0
    // Predicated region
    $region2: #{tpu_custom_call.1} parent=1 // pred_check
      _
    $region3: #{tpu_custom_call.1} parent=1 // pred_check_branch
      %12 = sbr.rel (0) target = $region5
    $region4: #{tpu_custom_call.1} parent=1 // pred_region
      %s14 = ssub.s32 2048, 2048
      %15 = vsyncadd [#allocation3], %s14
      %s16 = sshll.u32 [#allocation2], 4
      %s17 = int_to_ptr.vmem [resolvable:$true] %s16
      %22 = dma.hbm_to_vmem [thread:$0]  %s0, 2048, %s17, [#allocation3], 128, 128, 8
    $region5: #{tpu_custom_call.1} parent=1 // pred_fallthru
      _
    // Predicated region
    $region6: #{tpu_custom_call.1} parent=1 // pred_check
      _
    $region7: #{tpu_custom_call.1} parent=1 // pred_check_branch
      %24 = sbr.rel (0) target = $region9
    $region8: #{tpu_custom_call.1} parent=1 // pred_region
      _
    $region9: #{tpu_custom_call.1} parent=1 // pred_fallthru
      _
    // Predicated region
    $region10: #{tpu_custom_call.1} parent=1 // pred_check
      _
    $region11: #{tpu_custom_call.1} parent=1 // pred_check_branch
      %26 = sbr.rel (0) target = $region13
    $region12: #{tpu_custom_call.1} parent=1 // pred_region
      %s28 = ssub.s32 2048, 2048
      %29 = vsyncadd [#allocation6], %s28
      %s30 = sshll.u32 [#allocation5], 4
      %s31 = int_to_ptr.vmem [resolvable:$true] %s30
      %36 = dma.hbm_to_vmem [thread:$0]  %s2, 2048, %s31, [#allocation6], 128, 128, 8
    $region13: #{tpu_custom_call.1} parent=1 // pred_fallthru
      _
    // Predicated region
    $region14: #{tpu_custom_call.1} parent=1 // pred_check
      _
    $region15: #{tpu_custom_call.1} parent=1 // pred_check_branch
      %38 = sbr.rel (0) target = $region17
    $region16: #{tpu_custom_call.1} parent=1 // pred_region
      %39 = dma.done [#allocation3], 2048
    $region17: #{tpu_custom_call.1} parent=1 // pred_fallthru
      _
    // Predicated region
    $region18: #{tpu_custom_call.1} parent=1 // pred_check
      _
    $region19: #{tpu_custom_call.1} parent=1 // pred_check_branch
      %41 = sbr.rel (0) target = $region21
    $region20: #{tpu_custom_call.1} parent=1 // pred_region
      %42 = dma.done [#allocation6], 2048
    $region21: #{tpu_custom_call.1} parent=1 // pred_fallthru
      _
    %s43 = smul.u32 0, 8
    %s44 = smul.u32 %s43, 8
    %s45 = scalar_lea.vmem %s1, %s44
    %v46 = vld [vmem:[%s45] sm:$0xff]
    %v47 = vld [vmem:[%s45 + $0x8] sm:$0xff]
    %v48 = vld [vmem:[%s45 + $0x10] sm:$0xff]
    %v49 = vld [vmem:[%s45 + $0x18] sm:$0xff]
    %v50 = vld [vmem:[%s45 + $0x20] sm:$0xff]
    %v51 = vld [vmem:[%s45 + $0x28] sm:$0xff]
    %v52 = vld [vmem:[%s45 + $0x30] sm:$0xff]
    %v53 = vld [vmem:[%s45 + $0x38] sm:$0xff]
    %v54 = vld [vmem:[#allocation2] sm:$0xff]
    %v55 = vld [vmem:[#allocation2 + $0x8] sm:$0xff]
    %v56 = vld [vmem:[#allocation2 + $0x10] sm:$0xff]
    %v57 = vld [vmem:[#allocation2 + $0x18] sm:$0xff]
    %v58 = vld [vmem:[#allocation2 + $0x20] sm:$0xff]
    %v59 = vld [vmem:[#allocation2 + $0x28] sm:$0xff]
    %v60 = vld [vmem:[#allocation2 + $0x30] sm:$0xff]
    %v61 = vld [vmem:[#allocation2 + $0x38] sm:$0xff]
    %v62 = vld [vmem:[#allocation2 + $0x40] sm:$0xff]
    %v63 = vld [vmem:[#allocation2 + $0x48] sm:$0xff]
    %v64 = vld [vmem:[#allocation2 + $0x50] sm:$0xff]
    %v65 = vld [vmem:[#allocation2 + $0x58] sm:$0xff]
    %v66 = vld [vmem:[#allocation2 + $0x60] sm:$0xff]
    %v67 = vld [vmem:[#allocation2 + $0x68] sm:$0xff]
    %v68 = vld [vmem:[#allocation2 + $0x70] sm:$0xff]
    %v69 = vld [vmem:[#allocation2 + $0x78] sm:$0xff]
    %v70 = vld [vmem:[#allocation5] sm:$0xff]
    %v71 = vld [vmem:[#allocation5 + $0x8] sm:$0xff]
    %v72 = vld [vmem:[#allocation5 + $0x10] sm:$0xff]
    %v73 = vld [vmem:[#allocation5 + $0x18] sm:$0xff]
    %v74 = vld [vmem:[#allocation5 + $0x20] sm:$0xff]
    %v75 = vld [vmem:[#allocation5 + $0x28] sm:$0xff]
    %v76 = vld [vmem:[#allocation5 + $0x30] sm:$0xff]
    %v77 = vld [vmem:[#allocation5 + $0x38] sm:$0xff]
    %v78 = vld [vmem:[#allocation5 + $0x40] sm:$0xff]
    %v79 = vld [vmem:[#allocation5 + $0x48] sm:$0xff]
    %v80 = vld [vmem:[#allocation5 + $0x50] sm:$0xff]
    %v81 = vld [vmem:[#allocation5 + $0x58] sm:$0xff]
    %v82 = vld [vmem:[#allocation5 + $0x60] sm:$0xff]
    %v83 = vld [vmem:[#allocation5 + $0x68] sm:$0xff]
    %v84 = vld [vmem:[#allocation5 + $0x70] sm:$0xff]
    %v85 = vld [vmem:[#allocation5 + $0x78] sm:$0xff]
    %87 = vset.pattern.permute.xlu0 0
    %88 = vperm.xlu0 %87, %v46
    %v89 = vpop.permute.xlu0 %88
    %92 = vset.pattern.permute.xlu0 0
    %93 = vperm.xlu0 %92, %v47
    %v94 = vpop.permute.xlu0 %93
    %97 = vset.pattern.permute.xlu0 0
    %98 = vperm.xlu0 %97, %v48
    %v99 = vpop.permute.xlu0 %98
    %102 = vset.pattern.permute.xlu0 0
    %103 = vperm.xlu0 %102, %v49
    %v104 = vpop.permute.xlu0 %103
    %107 = vset.pattern.permute.xlu0 0
    %108 = vperm.xlu0 %107, %v50
    %v109 = vpop.permute.xlu0 %108
    %112 = vset.pattern.permute.xlu0 0
    %113 = vperm.xlu0 %112, %v51
    %v114 = vpop.permute.xlu0 %113
    %117 = vset.pattern.permute.xlu0 0
    %118 = vperm.xlu0 %117, %v52
    %v119 = vpop.permute.xlu0 %118
    %122 = vset.pattern.permute.xlu0 0
    %123 = vperm.xlu0 %122, %v53
    %v124 = vpop.permute.xlu0 %123
    %v126 = vmul.f32 %v54, %v89
    %v127 = vmul.f32 %v55, %v89
    %v128 = vmul.f32 %v56, %v94
    %v129 = vmul.f32 %v57, %v94
    %v130 = vmul.f32 %v58, %v99
    %v131 = vmul.f32 %v59, %v99
    %v132 = vmul.f32 %v60, %v104
    %v133 = vmul.f32 %v61, %v104
    %v134 = vmul.f32 %v62, %v109
    %v135 = vmul.f32 %v63, %v109
    %v136 = vmul.f32 %v64, %v114
    %v137 = vmul.f32 %v65, %v114
    %v138 = vmul.f32 %v66, %v119
    %v139 = vmul.f32 %v67, %v119
    %v140 = vmul.f32 %v68, %v124
    %v141 = vmul.f32 %v69, %v124
    %vm142 = vcmask 130048
    %v143 = vsel %vm142, %v126, 0.0
    %v144 = vrot.slane %v143, 4
    %v145 = vadd.f32 %v143, %v144
    %v146 = vrot.slane %v145, 2
    %v147 = vadd.f32 %v145, %v146
    %v148 = vrot.slane %v147, 1
    %v149 = vadd.f32 %v147, %v148
    %v150 = vsel %vm142, %v127, 0.0
    %v151 = vrot.slane %v150, 4
    %v152 = vadd.f32 %v150, %v151
    %v153 = vrot.slane %v152, 2
    %v154 = vadd.f32 %v152, %v153
    %v155 = vrot.slane %v154, 1
    %v156 = vadd.f32 %v154, %v155
    %v157 = vsel %vm142, %v128, 0.0
    %v158 = vrot.slane %v157, 4
    %v159 = vadd.f32 %v157, %v158
    %v160 = vrot.slane %v159, 2
    %v161 = vadd.f32 %v159, %v160
    %v162 = vrot.slane %v161, 1
    %v163 = vadd.f32 %v161, %v162
    %v164 = vsel %vm142, %v129, 0.0
    %v165 = vrot.slane %v164, 4
    %v166 = vadd.f32 %v164, %v165
    %v167 = vrot.slane %v166, 2
    %v168 = vadd.f32 %v166, %v167
    %v169 = vrot.slane %v168, 1
    %v170 = vadd.f32 %v168, %v169
    %v171 = vsel %vm142, %v130, 0.0
    %v172 = vrot.slane %v171, 4
    %v173 = vadd.f32 %v171, %v172
    %v174 = vrot.slane %v173, 2
    %v175 = vadd.f32 %v173, %v174
    %v176 = vrot.slane %v175, 1
    %v177 = vadd.f32 %v175, %v176
    %v178 = vsel %vm142, %v131, 0.0
    %v179 = vrot.slane %v178, 4
    %v180 = vadd.f32 %v178, %v179
    %v181 = vrot.slane %v180, 2
    %v182 = vadd.f32 %v180, %v181
    %v183 = vrot.slane %v182, 1
    %v184 = vadd.f32 %v182, %v183
    %v185 = vsel %vm142, %v132, 0.0
    %v186 = vrot.slane %v185, 4
    %v187 = vadd.f32 %v185, %v186
    %v188 = vrot.slane %v187, 2
    %v189 = vadd.f32 %v187, %v188
    %v190 = vrot.slane %v189, 1
    %v191 = vadd.f32 %v189, %v190
    %v192 = vsel %vm142, %v133, 0.0
    %v193 = vrot.slane %v192, 4
    %v194 = vadd.f32 %v192, %v193
    %v195 = vrot.slane %v194, 2
    %v196 = vadd.f32 %v194, %v195
    %v197 = vrot.slane %v196, 1
    %v198 = vadd.f32 %v196, %v197
    %v199 = vsel %vm142, %v134, 0.0
    %v200 = vrot.slane %v199, 4
    %v201 = vadd.f32 %v199, %v200
    %v202 = vrot.slane %v201, 2
    %v203 = vadd.f32 %v201, %v202
    %v204 = vrot.slane %v203, 1
    %v205 = vadd.f32 %v203, %v204
    %v206 = vsel %vm142, %v135, 0.0
    %v207 = vrot.slane %v206, 4
    %v208 = vadd.f32 %v206, %v207
    %v209 = vrot.slane %v208, 2
    %v210 = vadd.f32 %v208, %v209
    %v211 = vrot.slane %v210, 1
    %v212 = vadd.f32 %v210, %v211
    %v213 = vsel %vm142, %v136, 0.0
    %v214 = vrot.slane %v213, 4
    %v215 = vadd.f32 %v213, %v214
    %v216 = vrot.slane %v215, 2
    %v217 = vadd.f32 %v215, %v216
    %v218 = vrot.slane %v217, 1
    %v219 = vadd.f32 %v217, %v218
    %v220 = vsel %vm142, %v137, 0.0
    %v221 = vrot.slane %v220, 4
    %v222 = vadd.f32 %v220, %v221
    %v223 = vrot.slane %v222, 2
    %v224 = vadd.f32 %v222, %v223
    %v225 = vrot.slane %v224, 1
    %v226 = vadd.f32 %v224, %v225
    %v227 = vsel %vm142, %v138, 0.0
    %v228 = vrot.slane %v227, 4
    %v229 = vadd.f32 %v227, %v228
    %v230 = vrot.slane %v229, 2
    %v231 = vadd.f32 %v229, %v230
    %v232 = vrot.slane %v231, 1
    %v233 = vadd.f32 %v231, %v232
    %v234 = vsel %vm142, %v139, 0.0
    %v235 = vrot.slane %v234, 4
    %v236 = vadd.f32 %v234, %v235
    %v237 = vrot.slane %v236, 2
    %v238 = vadd.f32 %v236, %v237
    %v239 = vrot.slane %v238, 1
    %v240 = vadd.f32 %v238, %v239
    %v241 = vsel %vm142, %v140, 0.0
    %v242 = vrot.slane %v241, 4
    %v243 = vadd.f32 %v241, %v242
    %v244 = vrot.slane %v243, 2
    %v245 = vadd.f32 %v243, %v244
    %v246 = vrot.slane %v245, 1
    %v247 = vadd.f32 %v245, %v246
    %v248 = vsel %vm142, %v141, 0.0
    %v249 = vrot.slane %v248, 4
    %v250 = vadd.f32 %v248, %v249
    %v251 = vrot.slane %v250, 2
    %v252 = vadd.f32 %v250, %v251
    %v253 = vrot.slane %v252, 1
    %v254 = vadd.f32 %v252, %v253
    %vm257 = vcmask 1041409
    %v258 = vsel %vm257, %v156, %v149
    %v259 = vsel %vm142, %v258, 0
    %261 = vmatprep.subr.mxu0 0.0
    %262 = vmatpush1.msra.mxu0 0.0
    %263 = vmatprep.subr.mxu0 0.0
    %264 = vmatpush1.msra.mxu0 0.0
    %265 = vmatprep.subr.mxu0 0.0
    %266 = vmatpush1.msra.mxu0 0.0
    %267 = vmatprep.subr.mxu0 0.0
    %268 = vmatpush1.msra.mxu0 0.0
    %269 = vmatprep.subr.mxu0 0.0
    %270 = vmatpush1.msra.mxu0 0.0
    %271 = vmatprep.subr.mxu0 0.0
    %272 = vmatpush1.msra.mxu0 0.0
    %273 = vmatprep.subr.mxu0 0.0
    %274 = vmatpush1.msra.mxu0 0.0
    %275 = vmatprep.subr.mxu0 0.0
    %276 = vmatpush1.msra.mxu0 0.0
    %277 = vmatprep.subr.mxu0 0.0
    %278 = vmatpush1.msra.mxu0 0.0
    %279 = vmatprep.subr.mxu0 0.0
    %280 = vmatpush1.msra.mxu0 0.0
    %281 = vmatprep.subr.mxu0 0.0
    %282 = vmatpush1.msra.mxu0 0.0
    %283 = vmatprep.subr.mxu0 0.0
    %284 = vmatpush1.msra.mxu0 0.0
    %285 = vmatprep.subr.mxu0 0.0
    %286 = vmatpush1.msra.mxu0 0.0
    %287 = vmatprep.subr.mxu0 0.0
    %288 = vmatpush1.msra.mxu0 0.0
    %289 = vmatprep.subr.mxu0 0.0
    %290 = vmatpush1.msra.mxu0 %v71
    %291 = vmatprep.subr.mxu0 0.0
    %292 = vmatpush1.msra.mxu0 %v70
    %293 = vmatprep.subr.mxu0 0.0
    %294 = vmatpush2.msra.mxu0 0.0
    %295 = vmatprep.subr.mxu0 0.0
    %296 = vmatpush2.msra.mxu0 0.0
    %297 = vmatprep.subr.mxu0 0.0
    %298 = vmatpush2.msra.mxu0 0.0
    %299 = vmatprep.subr.mxu0 0.0
    %300 = vmatpush2.msra.mxu0 0.0
    %301 = vmatprep.subr.mxu0 0.0
    %302 = vmatpush2.msra.mxu0 0.0
    %303 = vmatprep.subr.mxu0 0.0
    %304 = vmatpush2.msra.mxu0 0.0
    %305 = vmatprep.subr.mxu0 0.0
    %306 = vmatpush2.msra.mxu0 0.0
    %307 = vmatprep.subr.mxu0 0.0
    %308 = vmatpush2.msra.mxu0 0.0
    %309 = vmatprep.subr.mxu0 0.0
    %310 = vmatpush2.msra.mxu0 0.0
    %311 = vmatprep.subr.mxu0 0.0
    %312 = vmatpush2.msra.mxu0 0.0
    %313 = vmatprep.subr.mxu0 0.0
    %314 = vmatpush2.msra.mxu0 0.0
    %315 = vmatprep.subr.mxu0 0.0
    %316 = vmatpush2.msra.mxu0 0.0
    %317 = vmatprep.subr.mxu0 0.0
    %318 = vmatpush2.msra.mxu0 0.0
    %319 = vmatprep.subr.mxu0 0.0
    %320 = vmatpush2.msra.mxu0 0.0
    %321 = vmatprep.subr.mxu0 0.0
    %322 = vmatpush2.msra.mxu0 0.0
    %323 = vmatprep.subr.mxu0 0.0
    %324 = vmatpush2.msra.mxu0 0.0
    %325 = vmatprep.mubr.f32.mxu0 0.0
    %326 = vmatmul.mubr.f32.gmra.mxu0 %v259
    %v327 = vpop.f32.mrf.mxu0
    %v328 = vadd.f32 0.0, %v327
    %v329 = vpop.f32.mrf.mxu0
    %330 = vdwg.mxu0
    %v333 = vsel %vm257, %v170, %v163
    %v334 = vsel %vm142, %v333, 0
    %336 = vmatprep.subr.mxu0 0.0
    %337 = vmatpush1.msra.mxu0 0.0
    %338 = vmatprep.subr.mxu0 0.0
    %339 = vmatpush1.msra.mxu0 0.0
    %340 = vmatprep.subr.mxu0 0.0
    %341 = vmatpush1.msra.mxu0 0.0
    %342 = vmatprep.subr.mxu0 0.0
    %343 = vmatpush1.msra.mxu0 0.0
    %344 = vmatprep.subr.mxu0 0.0
    %345 = vmatpush1.msra.mxu0 0.0
    %346 = vmatprep.subr.mxu0 0.0
    %347 = vmatpush1.msra.mxu0 0.0
    %348 = vmatprep.subr.mxu0 0.0
    %349 = vmatpush1.msra.mxu0 0.0
    %350 = vmatprep.subr.mxu0 0.0
    %351 = vmatpush1.msra.mxu0 0.0
    %352 = vmatprep.subr.mxu0 0.0
    %353 = vmatpush1.msra.mxu0 0.0
    %354 = vmatprep.subr.mxu0 0.0
    %355 = vmatpush1.msra.mxu0 0.0
    %356 = vmatprep.subr.mxu0 0.0
    %357 = vmatpush1.msra.mxu0 0.0
    %358 = vmatprep.subr.mxu0 0.0
    %359 = vmatpush1.msra.mxu0 0.0
    %360 = vmatprep.subr.mxu0 0.0
    %361 = vmatpush1.msra.mxu0 0.0
    %362 = vmatprep.subr.mxu0 0.0
    %363 = vmatpush1.msra.mxu0 0.0
    %364 = vmatprep.subr.mxu0 0.0
    %365 = vmatpush1.msra.mxu0 %v73
    %366 = vmatprep.subr.mxu0 0.0
    %367 = vmatpush1.msra.mxu0 %v72
    %368 = vmatprep.subr.mxu0 0.0
    %369 = vmatpush2.msra.mxu0 0.0
    %370 = vmatprep.subr.mxu0 0.0
    %371 = vmatpush2.msra.mxu0 0.0
    %372 = vmatprep.subr.mxu0 0.0
    %373 = vmatpush2.msra.mxu0 0.0
    %374 = vmatprep.subr.mxu0 0.0
    %375 = vmatpush2.msra.mxu0 0.0
    %376 = vmatprep.subr.mxu0 0.0
    %377 = vmatpush2.msra.mxu0 0.0
    %378 = vmatprep.subr.mxu0 0.0
    %379 = vmatpush2.msra.mxu0 0.0
    %380 = vmatprep.subr.mxu0 0.0
    %381 = vmatpush2.msra.mxu0 0.0
    %382 = vmatprep.subr.mxu0 0.0
    %383 = vmatpush2.msra.mxu0 0.0
    %384 = vmatprep.subr.mxu0 0.0
    %385 = vmatpush2.msra.mxu0 0.0
    %386 = vmatprep.subr.mxu0 0.0
    %387 = vmatpush2.msra.mxu0 0.0
    %388 = vmatprep.subr.mxu0 0.0
    %389 = vmatpush2.msra.mxu0 0.0
    %390 = vmatprep.subr.mxu0 0.0
    %391 = vmatpush2.msra.mxu0 0.0
    %392 = vmatprep.subr.mxu0 0.0
    %393 = vmatpush2.msra.mxu0 0.0
    %394 = vmatprep.subr.mxu0 0.0
    %395 = vmatpush2.msra.mxu0 0.0
    %396 = vmatprep.subr.mxu0 0.0
    %397 = vmatpush2.msra.mxu0 0.0
    %398 = vmatprep.subr.mxu0 0.0
    %399 = vmatpush2.msra.mxu0 0.0
    %400 = vmatprep.mubr.f32.mxu0 0.0
    %401 = vmatmul.mubr.f32.gmra.mxu0 %v334
    %v402 = vpop.f32.mrf.mxu0
    %v403 = vadd.f32 0.0, %v402
    %v404 = vpop.f32.mrf.mxu0
    %405 = vdwg.mxu0
    %v408 = vsel %vm257, %v184, %v177
    %v409 = vsel %vm142, %v408, 0
    %411 = vmatprep.subr.mxu0 0.0
    %412 = vmatpush1.msra.mxu0 0.0
    %413 = vmatprep.subr.mxu0 0.0
    %414 = vmatpush1.msra.mxu0 0.0
    %415 = vmatprep.subr.mxu0 0.0
    %416 = vmatpush1.msra.mxu0 0.0
    %417 = vmatprep.subr.mxu0 0.0
    %418 = vmatpush1.msra.mxu0 0.0
    %419 = vmatprep.subr.mxu0 0.0
    %420 = vmatpush1.msra.mxu0 0.0
    %421 = vmatprep.subr.mxu0 0.0
    %422 = vmatpush1.msra.mxu0 0.0
    %423 = vmatprep.subr.mxu0 0.0
    %424 = vmatpush1.msra.mxu0 0.0
    %425 = vmatprep.subr.mxu0 0.0
    %426 = vmatpush1.msra.mxu0 0.0
    %427 = vmatprep.subr.mxu0 0.0
    %428 = vmatpush1.msra.mxu0 0.0
    %429 = vmatprep.subr.mxu0 0.0
    %430 = vmatpush1.msra.mxu0 0.0
    %431 = vmatprep.subr.mxu0 0.0
    %432 = vmatpush1.msra.mxu0 0.0
    %433 = vmatprep.subr.mxu0 0.0
    %434 = vmatpush1.msra.mxu0 0.0
    %435 = vmatprep.subr.mxu0 0.0
    %436 = vmatpush1.msra.mxu0 0.0
    %437 = vmatprep.subr.mxu0 0.0
    %438 = vmatpush1.msra.mxu0 0.0
    %439 = vmatprep.subr.mxu0 0.0
    %440 = vmatpush1.msra.mxu0 %v75
    %441 = vmatprep.subr.mxu0 0.0
    %442 = vmatpush1.msra.mxu0 %v74
    %443 = vmatprep.subr.mxu0 0.0
    %444 = vmatpush2.msra.mxu0 0.0
    %445 = vmatprep.subr.mxu0 0.0
    %446 = vmatpush2.msra.mxu0 0.0
    %447 = vmatprep.subr.mxu0 0.0
    %448 = vmatpush2.msra.mxu0 0.0
    %449 = vmatprep.subr.mxu0 0.0
    %450 = vmatpush2.msra.mxu0 0.0
    %451 = vmatprep.subr.mxu0 0.0
    %452 = vmatpush2.msra.mxu0 0.0
    %453 = vmatprep.subr.mxu0 0.0
    %454 = vmatpush2.msra.mxu0 0.0
    %455 = vmatprep.subr.mxu0 0.0
    %456 = vmatpush2.msra.mxu0 0.0
    %457 = vmatprep.subr.mxu0 0.0
    %458 = vmatpush2.msra.mxu0 0.0
    %459 = vmatprep.subr.mxu0 0.0
    %460 = vmatpush2.msra.mxu0 0.0
    %461 = vmatprep.subr.mxu0 0.0
    %462 = vmatpush2.msra.mxu0 0.0
    %463 = vmatprep.subr.mxu0 0.0
    %464 = vmatpush2.msra.mxu0 0.0
    %465 = vmatprep.subr.mxu0 0.0
    %466 = vmatpush2.msra.mxu0 0.0
    %467 = vmatprep.subr.mxu0 0.0
    %468 = vmatpush2.msra.mxu0 0.0
    %469 = vmatprep.subr.mxu0 0.0
    %470 = vmatpush2.msra.mxu0 0.0
    %471 = vmatprep.subr.mxu0 0.0
    %472 = vmatpush2.msra.mxu0 0.0
    %473 = vmatprep.subr.mxu0 0.0
    %474 = vmatpush2.msra.mxu0 0.0
    %475 = vmatprep.mubr.f32.mxu0 0.0
    %476 = vmatmul.mubr.f32.gmra.mxu0 %v409
    %v477 = vpop.f32.mrf.mxu0
    %v478 = vadd.f32 0.0, %v477
    %v479 = vpop.f32.mrf.mxu0
    %480 = vdwg.mxu0
    %v483 = vsel %vm257, %v198, %v191
    %v484 = vsel %vm142, %v483, 0
    %486 = vmatprep.subr.mxu0 0.0
    %487 = vmatpush1.msra.mxu0 0.0
    %488 = vmatprep.subr.mxu0 0.0
    %489 = vmatpush1.msra.mxu0 0.0
    %490 = vmatprep.subr.mxu0 0.0
    %491 = vmatpush1.msra.mxu0 0.0
    %492 = vmatprep.subr.mxu0 0.0
    %493 = vmatpush1.msra.mxu0 0.0
    %494 = vmatprep.subr.mxu0 0.0
    %495 = vmatpush1.msra.mxu0 0.0
    %496 = vmatprep.subr.mxu0 0.0
    %497 = vmatpush1.msra.mxu0 0.0
    %498 = vmatprep.subr.mxu0 0.0
    %499 = vmatpush1.msra.mxu0 0.0
    %500 = vmatprep.subr.mxu0 0.0
    %501 = vmatpush1.msra.mxu0 0.0
    %502 = vmatprep.subr.mxu0 0.0
    %503 = vmatpush1.msra.mxu0 0.0
    %504 = vmatprep.subr.mxu0 0.0
    %505 = vmatpush1.msra.mxu0 0.0
    %506 = vmatprep.subr.mxu0 0.0
    %507 = vmatpush1.msra.mxu0 0.0
    %508 = vmatprep.subr.mxu0 0.0
    %509 = vmatpush1.msra.mxu0 0.0
    %510 = vmatprep.subr.mxu0 0.0
    %511 = vmatpush1.msra.mxu0 0.0
    %512 = vmatprep.subr.mxu0 0.0
    %513 = vmatpush1.msra.mxu0 0.0
    %514 = vmatprep.subr.mxu0 0.0
    %515 = vmatpush1.msra.mxu0 %v77
    %516 = vmatprep.subr.mxu0 0.0
    %517 = vmatpush1.msra.mxu0 %v76
    %518 = vmatprep.subr.mxu0 0.0
    %519 = vmatpush2.msra.mxu0 0.0
    %520 = vmatprep.subr.mxu0 0.0
    %521 = vmatpush2.msra.mxu0 0.0
    %522 = vmatprep.subr.mxu0 0.0
    %523 = vmatpush2.msra.mxu0 0.0
    %524 = vmatprep.subr.mxu0 0.0
    %525 = vmatpush2.msra.mxu0 0.0
    %526 = vmatprep.subr.mxu0 0.0
    %527 = vmatpush2.msra.mxu0 0.0
    %528 = vmatprep.subr.mxu0 0.0
    %529 = vmatpush2.msra.mxu0 0.0
    %530 = vmatprep.subr.mxu0 0.0
    %531 = vmatpush2.msra.mxu0 0.0
    %532 = vmatprep.subr.mxu0 0.0
    %533 = vmatpush2.msra.mxu0 0.0
    %534 = vmatprep.subr.mxu0 0.0
    %535 = vmatpush2.msra.mxu0 0.0
    %536 = vmatprep.subr.mxu0 0.0
    %537 = vmatpush2.msra.mxu0 0.0
    %538 = vmatprep.subr.mxu0 0.0
    %539 = vmatpush2.msra.mxu0 0.0
    %540 = vmatprep.subr.mxu0 0.0
    %541 = vmatpush2.msra.mxu0 0.0
    %542 = vmatprep.subr.mxu0 0.0
    %543 = vmatpush2.msra.mxu0 0.0
    %544 = vmatprep.subr.mxu0 0.0
    %545 = vmatpush2.msra.mxu0 0.0
    %546 = vmatprep.subr.mxu0 0.0
    %547 = vmatpush2.msra.mxu0 0.0
    %548 = vmatprep.subr.mxu0 0.0
    %549 = vmatpush2.msra.mxu0 0.0
    %550 = vmatprep.mubr.f32.mxu0 0.0
    %551 = vmatmul.mubr.f32.gmra.mxu0 %v484
    %v552 = vpop.f32.mrf.mxu0
    %v553 = vadd.f32 0.0, %v552
    %v554 = vpop.f32.mrf.mxu0
    %555 = vdwg.mxu0
    %v558 = vsel %vm257, %v212, %v205
    %v559 = vsel %vm142, %v558, 0
    %561 = vmatprep.subr.mxu0 0.0
    %562 = vmatpush1.msra.mxu0 0.0
    %563 = vmatprep.subr.mxu0 0.0
    %564 = vmatpush1.msra.mxu0 0.0
    %565 = vmatprep.subr.mxu0 0.0
    %566 = vmatpush1.msra.mxu0 0.0
    %567 = vmatprep.subr.mxu0 0.0
    %568 = vmatpush1.msra.mxu0 0.0
    %569 = vmatprep.subr.mxu0 0.0
    %570 = vmatpush1.msra.mxu0 0.0
    %571 = vmatprep.subr.mxu0 0.0
    %572 = vmatpush1.msra.mxu0 0.0
    %573 = vmatprep.subr.mxu0 0.0
    %574 = vmatpush1.msra.mxu0 0.0
    %575 = vmatprep.subr.mxu0 0.0
    %576 = vmatpush1.msra.mxu0 0.0
    %577 = vmatprep.subr.mxu0 0.0
    %578 = vmatpush1.msra.mxu0 0.0
    %579 = vmatprep.subr.mxu0 0.0
    %580 = vmatpush1.msra.mxu0 0.0
    %581 = vmatprep.subr.mxu0 0.0
    %582 = vmatpush1.msra.mxu0 0.0
    %583 = vmatprep.subr.mxu0 0.0
    %584 = vmatpush1.msra.mxu0 0.0
    %585 = vmatprep.subr.mxu0 0.0
    %586 = vmatpush1.msra.mxu0 0.0
    %587 = vmatprep.subr.mxu0 0.0
    %588 = vmatpush1.msra.mxu0 0.0
    %589 = vmatprep.subr.mxu0 0.0
    %590 = vmatpush1.msra.mxu0 %v79
    %591 = vmatprep.subr.mxu0 0.0
    %592 = vmatpush1.msra.mxu0 %v78
    %593 = vmatprep.subr.mxu0 0.0
    %594 = vmatpush2.msra.mxu0 0.0
    %595 = vmatprep.subr.mxu0 0.0
    %596 = vmatpush2.msra.mxu0 0.0
    %597 = vmatprep.subr.mxu0 0.0
    %598 = vmatpush2.msra.mxu0 0.0
    %599 = vmatprep.subr.mxu0 0.0
    %600 = vmatpush2.msra.mxu0 0.0
    %601 = vmatprep.subr.mxu0 0.0
    %602 = vmatpush2.msra.mxu0 0.0
    %603 = vmatprep.subr.mxu0 0.0
    %604 = vmatpush2.msra.mxu0 0.0
    %605 = vmatprep.subr.mxu0 0.0
    %606 = vmatpush2.msra.mxu0 0.0
    %607 = vmatprep.subr.mxu0 0.0
    %608 = vmatpush2.msra.mxu0 0.0
    %609 = vmatprep.subr.mxu0 0.0
    %610 = vmatpush2.msra.mxu0 0.0
    %611 = vmatprep.subr.mxu0 0.0
    %612 = vmatpush2.msra.mxu0 0.0
    %613 = vmatprep.subr.mxu0 0.0
    %614 = vmatpush2.msra.mxu0 0.0
    %615 = vmatprep.subr.mxu0 0.0
    %616 = vmatpush2.msra.mxu0 0.0
    %617 = vmatprep.subr.mxu0 0.0
    %618 = vmatpush2.msra.mxu0 0.0
    %619 = vmatprep.subr.mxu0 0.0
    %620 = vmatpush2.msra.mxu0 0.0
    %621 = vmatprep.subr.mxu0 0.0
    %622 = vmatpush2.msra.mxu0 0.0
    %623 = vmatprep.subr.mxu0 0.0
    %624 = vmatpush2.msra.mxu0 0.0
    %625 = vmatprep.mubr.f32.mxu0 0.0
    %626 = vmatmul.mubr.f32.gmra.mxu0 %v559
    %v627 = vpop.f32.mrf.mxu0
    %v628 = vadd.f32 0.0, %v627
    %v629 = vpop.f32.mrf.mxu0
    %630 = vdwg.mxu0
    %v633 = vsel %vm257, %v226, %v219
    %v634 = vsel %vm142, %v633, 0
    %636 = vmatprep.subr.mxu0 0.0
    %637 = vmatpush1.msra.mxu0 0.0
    %638 = vmatprep.subr.mxu0 0.0
    %639 = vmatpush1.msra.mxu0 0.0
    %640 = vmatprep.subr.mxu0 0.0
    %641 = vmatpush1.msra.mxu0 0.0
    %642 = vmatprep.subr.mxu0 0.0
    %643 = vmatpush1.msra.mxu0 0.0
    %644 = vmatprep.subr.mxu0 0.0
    %645 = vmatpush1.msra.mxu0 0.0
    %646 = vmatprep.subr.mxu0 0.0
    %647 = vmatpush1.msra.mxu0 0.0
    %648 = vmatprep.subr.mxu0 0.0
    %649 = vmatpush1.msra.mxu0 0.0
    %650 = vmatprep.subr.mxu0 0.0
    %651 = vmatpush1.msra.mxu0 0.0
    %652 = vmatprep.subr.mxu0 0.0
    %653 = vmatpush1.msra.mxu0 0.0
    %654 = vmatprep.subr.mxu0 0.0
    %655 = vmatpush1.msra.mxu0 0.0
    %656 = vmatprep.subr.mxu0 0.0
    %657 = vmatpush1.msra.mxu0 0.0
    %658 = vmatprep.subr.mxu0 0.0
    %659 = vmatpush1.msra.mxu0 0.0
    %660 = vmatprep.subr.mxu0 0.0
    %661 = vmatpush1.msra.mxu0 0.0
    %662 = vmatprep.subr.mxu0 0.0
    %663 = vmatpush1.msra.mxu0 0.0
    %664 = vmatprep.subr.mxu0 0.0
    %665 = vmatpush1.msra.mxu0 %v81
    %666 = vmatprep.subr.mxu0 0.0
    %667 = vmatpush1.msra.mxu0 %v80
    %668 = vmatprep.subr.mxu0 0.0
    %669 = vmatpush2.msra.mxu0 0.0
    %670 = vmatprep.subr.mxu0 0.0
    %671 = vmatpush2.msra.mxu0 0.0
    %672 = vmatprep.subr.mxu0 0.0
    %673 = vmatpush2.msra.mxu0 0.0
    %674 = vmatprep.subr.mxu0 0.0
    %675 = vmatpush2.msra.mxu0 0.0
    %676 = vmatprep.subr.mxu0 0.0
    %677 = vmatpush2.msra.mxu0 0.0
    %678 = vmatprep.subr.mxu0 0.0
    %679 = vmatpush2.msra.mxu0 0.0
    %680 = vmatprep.subr.mxu0 0.0
    %681 = vmatpush2.msra.mxu0 0.0
    %682 = vmatprep.subr.mxu0 0.0
    %683 = vmatpush2.msra.mxu0 0.0
    %684 = vmatprep.subr.mxu0 0.0
    %685 = vmatpush2.msra.mxu0 0.0
    %686 = vmatprep.subr.mxu0 0.0
    %687 = vmatpush2.msra.mxu0 0.0
    %688 = vmatprep.subr.mxu0 0.0
    %689 = vmatpush2.msra.mxu0 0.0
    %690 = vmatprep.subr.mxu0 0.0
    %691 = vmatpush2.msra.mxu0 0.0
    %692 = vmatprep.subr.mxu0 0.0
    %693 = vmatpush2.msra.mxu0 0.0
    %694 = vmatprep.subr.mxu0 0.0
    %695 = vmatpush2.msra.mxu0 0.0
    %696 = vmatprep.subr.mxu0 0.0
    %697 = vmatpush2.msra.mxu0 0.0
    %698 = vmatprep.subr.mxu0 0.0
    %699 = vmatpush2.msra.mxu0 0.0
    %700 = vmatprep.mubr.f32.mxu0 0.0
    %701 = vmatmul.mubr.f32.gmra.mxu0 %v634
    %v702 = vpop.f32.mrf.mxu0
    %v703 = vadd.f32 0.0, %v702
    %v704 = vpop.f32.mrf.mxu0
    %705 = vdwg.mxu0
    %v708 = vsel %vm257, %v240, %v233
    %v709 = vsel %vm142, %v708, 0
    %711 = vmatprep.subr.mxu0 0.0
    %712 = vmatpush1.msra.mxu0 0.0
    %713 = vmatprep.subr.mxu0 0.0
    %714 = vmatpush1.msra.mxu0 0.0
    %715 = vmatprep.subr.mxu0 0.0
    %716 = vmatpush1.msra.mxu0 0.0
    %717 = vmatprep.subr.mxu0 0.0
    %718 = vmatpush1.msra.mxu0 0.0
    %719 = vmatprep.subr.mxu0 0.0
    %720 = vmatpush1.msra.mxu0 0.0
    %721 = vmatprep.subr.mxu0 0.0
    %722 = vmatpush1.msra.mxu0 0.0
    %723 = vmatprep.subr.mxu0 0.0
    %724 = vmatpush1.msra.mxu0 0.0
    %725 = vmatprep.subr.mxu0 0.0
    %726 = vmatpush1.msra.mxu0 0.0
    %727 = vmatprep.subr.mxu0 0.0
    %728 = vmatpush1.msra.mxu0 0.0
    %729 = vmatprep.subr.mxu0 0.0
    %730 = vmatpush1.msra.mxu0 0.0
    %731 = vmatprep.subr.mxu0 0.0
    %732 = vmatpush1.msra.mxu0 0.0
    %733 = vmatprep.subr.mxu0 0.0
    %734 = vmatpush1.msra.mxu0 0.0
    %735 = vmatprep.subr.mxu0 0.0
    %736 = vmatpush1.msra.mxu0 0.0
    %737 = vmatprep.subr.mxu0 0.0
    %738 = vmatpush1.msra.mxu0 0.0
    %739 = vmatprep.subr.mxu0 0.0
    %740 = vmatpush1.msra.mxu0 %v83
    %741 = vmatprep.subr.mxu0 0.0
    %742 = vmatpush1.msra.mxu0 %v82
    %743 = vmatprep.subr.mxu0 0.0
    %744 = vmatpush2.msra.mxu0 0.0
    %745 = vmatprep.subr.mxu0 0.0
    %746 = vmatpush2.msra.mxu0 0.0
    %747 = vmatprep.subr.mxu0 0.0
    %748 = vmatpush2.msra.mxu0 0.0
    %749 = vmatprep.subr.mxu0 0.0
    %750 = vmatpush2.msra.mxu0 0.0
    %751 = vmatprep.subr.mxu0 0.0
    %752 = vmatpush2.msra.mxu0 0.0
    %753 = vmatprep.subr.mxu0 0.0
    %754 = vmatpush2.msra.mxu0 0.0
    %755 = vmatprep.subr.mxu0 0.0
    %756 = vmatpush2.msra.mxu0 0.0
    %757 = vmatprep.subr.mxu0 0.0
    %758 = vmatpush2.msra.mxu0 0.0
    %759 = vmatprep.subr.mxu0 0.0
    %760 = vmatpush2.msra.mxu0 0.0
    %761 = vmatprep.subr.mxu0 0.0
    %762 = vmatpush2.msra.mxu0 0.0
    %763 = vmatprep.subr.mxu0 0.0
    %764 = vmatpush2.msra.mxu0 0.0
    %765 = vmatprep.subr.mxu0 0.0
    %766 = vmatpush2.msra.mxu0 0.0
    %767 = vmatprep.subr.mxu0 0.0
    %768 = vmatpush2.msra.mxu0 0.0
    %769 = vmatprep.subr.mxu0 0.0
    %770 = vmatpush2.msra.mxu0 0.0
    %771 = vmatprep.subr.mxu0 0.0
    %772 = vmatpush2.msra.mxu0 0.0
    %773 = vmatprep.subr.mxu0 0.0
    %774 = vmatpush2.msra.mxu0 0.0
    %775 = vmatprep.mubr.f32.mxu0 0.0
    %776 = vmatmul.mubr.f32.gmra.mxu0 %v709
    %v777 = vpop.f32.mrf.mxu0
    %v778 = vadd.f32 0.0, %v777
    %v779 = vpop.f32.mrf.mxu0
    %780 = vdwg.mxu0
    %v783 = vsel %vm257, %v254, %v247
    %v784 = vsel %vm142, %v783, 0
    %786 = vmatprep.subr.mxu0 0.0
    %787 = vmatpush1.msra.mxu0 0.0
    %788 = vmatprep.subr.mxu0 0.0
    %789 = vmatpush1.msra.mxu0 0.0
    %790 = vmatprep.subr.mxu0 0.0
    %791 = vmatpush1.msra.mxu0 0.0
    %792 = vmatprep.subr.mxu0 0.0
    %793 = vmatpush1.msra.mxu0 0.0
    %794 = vmatprep.subr.mxu0 0.0
    %795 = vmatpush1.msra.mxu0 0.0
    %796 = vmatprep.subr.mxu0 0.0
    %797 = vmatpush1.msra.mxu0 0.0
    %798 = vmatprep.subr.mxu0 0.0
    %799 = vmatpush1.msra.mxu0 0.0
    %800 = vmatprep.subr.mxu0 0.0
    %801 = vmatpush1.msra.mxu0 0.0
    %802 = vmatprep.subr.mxu0 0.0
    %803 = vmatpush1.msra.mxu0 0.0
    %804 = vmatprep.subr.mxu0 0.0
    %805 = vmatpush1.msra.mxu0 0.0
    %806 = vmatprep.subr.mxu0 0.0
    %807 = vmatpush1.msra.mxu0 0.0
    %808 = vmatprep.subr.mxu0 0.0
    %809 = vmatpush1.msra.mxu0 0.0
    %810 = vmatprep.subr.mxu0 0.0
    %811 = vmatpush1.msra.mxu0 0.0
    %812 = vmatprep.subr.mxu0 0.0
    %813 = vmatpush1.msra.mxu0 0.0
    %814 = vmatprep.subr.mxu0 0.0
    %815 = vmatpush1.msra.mxu0 %v85
    %816 = vmatprep.subr.mxu0 0.0
    %817 = vmatpush1.msra.mxu0 %v84
    %818 = vmatprep.subr.mxu0 0.0
    %819 = vmatpush2.msra.mxu0 0.0
    %820 = vmatprep.subr.mxu0 0.0
    %821 = vmatpush2.msra.mxu0 0.0
    %822 = vmatprep.subr.mxu0 0.0
    %823 = vmatpush2.msra.mxu0 0.0
    %824 = vmatprep.subr.mxu0 0.0
    %825 = vmatpush2.msra.mxu0 0.0
    %826 = vmatprep.subr.mxu0 0.0
    %827 = vmatpush2.msra.mxu0 0.0
    %828 = vmatprep.subr.mxu0 0.0
    %829 = vmatpush2.msra.mxu0 0.0
    %830 = vmatprep.subr.mxu0 0.0
    %831 = vmatpush2.msra.mxu0 0.0
    %832 = vmatprep.subr.mxu0 0.0
    %833 = vmatpush2.msra.mxu0 0.0
    %834 = vmatprep.subr.mxu0 0.0
    %835 = vmatpush2.msra.mxu0 0.0
    %836 = vmatprep.subr.mxu0 0.0
    %837 = vmatpush2.msra.mxu0 0.0
    %838 = vmatprep.subr.mxu0 0.0
    %839 = vmatpush2.msra.mxu0 0.0
    %840 = vmatprep.subr.mxu0 0.0
    %841 = vmatpush2.msra.mxu0 0.0
    %842 = vmatprep.subr.mxu0 0.0
    %843 = vmatpush2.msra.mxu0 0.0
    %844 = vmatprep.subr.mxu0 0.0
    %845 = vmatpush2.msra.mxu0 0.0
    %846 = vmatprep.subr.mxu0 0.0
    %847 = vmatpush2.msra.mxu0 0.0
    %848 = vmatprep.subr.mxu0 0.0
    %849 = vmatpush2.msra.mxu0 0.0
    %850 = vmatprep.mubr.f32.mxu0 0.0
    %851 = vmatmul.mubr.f32.gmra.mxu0 %v784
    %v852 = vpop.f32.mrf.mxu0
    %v853 = vadd.f32 0.0, %v852
    %v854 = vpop.f32.mrf.mxu0
    %855 = vdwg.mxu0
    %v864 = vcombine.low %v328, %v403
    %v865 = vcombine.low %v478, %v553
    %v867 = vunpack.c.l.s4 1983009808
    %v868 = vunpack.c.0.s8 %v867
    %v869 = vlaneseq
    %v870 = vshrl.u32 %v869, 7
    %v871 = vsub.s32 %v868, %v870
    %v872 = vrot.slane %v864, %v871
    %v874 = vunpack.c.l.s4 1983009808
    %v875 = vunpack.c.0.s8 %v874
    %v876 = vlaneseq
    %v877 = vshrl.u32 %v876, 7
    %v878 = vsub.s32 %v875, %v877
    %v879 = vrot.slane %v865, %v878
    %v880 = vcombine.low %v872, %v879
    %v881 = vcombine.low %v628, %v703
    %v882 = vcombine.low %v778, %v853
    %v884 = vunpack.c.l.s4 1983009808
    %v885 = vunpack.c.0.s8 %v884
    %v886 = vlaneseq
    %v887 = vshrl.u32 %v886, 7
    %v888 = vsub.s32 %v885, %v887
    %v889 = vrot.slane %v881, %v888
    %v891 = vunpack.c.l.s4 1983009808
    %v892 = vunpack.c.0.s8 %v891
    %v893 = vlaneseq
    %v894 = vshrl.u32 %v893, 7
    %v895 = vsub.s32 %v892, %v894
    %v896 = vrot.slane %v882, %v895
    %v897 = vcombine.low %v889, %v896
    %900 = vst [vmem:[#allocation7] sm:$0xff] %v880
    %901 = vst [vmem:[#allocation7 + $0x8] sm:$0xff] %v897
    // Predicated region
    $region22: #{tpu_custom_call.1} parent=1 // pred_check
      _
    $region23: #{tpu_custom_call.1} parent=1 // pred_check_branch
      %903 = sbr.rel (0) target = $region25
    $region24: #{tpu_custom_call.1} parent=1 // pred_region
      %s905 = ssub.s32 256, 256
      %906 = vsyncadd [#allocation4], %s905
      %s907 = sshll.u32 [#allocation7], 4
      %s908 = int_to_ptr.vmem [resolvable:$true] %s907
      %913 = dma.vmem_to_hbm [thread:$0]  %s908, 256, %s3, [#allocation4], 128, 128, 8
    $region25: #{tpu_custom_call.1} parent=1 // pred_fallthru
      _
    // Predicated region
    $region26: #{tpu_custom_call.1} parent=1 // pred_check
      _
    $region27: #{tpu_custom_call.1} parent=1 // pred_check_branch
      %915 = sbr.rel (0) target = $region29
    $region28: #{tpu_custom_call.1} parent=1 // pred_region
      %916 = dma.done [#allocation4], 256
    $region29: #{tpu_custom_call.1} parent=1 // pred_fallthru
      _
    %917 = vsyncpa [#allocation3], 1
    %918 = vsyncpa [#allocation6], 1
    %919 = vsyncpa [#allocation4], 1

</llo_original>
